<compile_context>
chip_gen: v6e
topology: v6e:2x2x1
jax: 0.10.0
libtpu: 0.0.40
codegen_flags: <defaults>
</compile_context>

<pallas_src>
import math
import jax
import jax.numpy as jnp
from jax.experimental import pallas as pl
from jax.experimental.pallas import tpu as pltpu


def _round_up(x, m):
    return ((x + m - 1) // m) * m


def _policy_kernel(x_ref, w1_ref, b1_ref, w2_ref, b2_ref, wm_ref, bm_ref,
                   scale_ref, bias_ref, out_ref):
    # Fused 3-layer MLP head; everything fits in VMEM.  Matmuls run in bf16 on
    # the MXU with f32 accumulation; elementwise math stays in f32.
    x = x_ref[...]                                                       # bf16
    h1 = jnp.dot(x, w1_ref[...], preferred_element_type=jnp.float32) + b1_ref[...]
    h1 = jnp.maximum(h1, 0.0)
    h2 = jnp.dot(h1.astype(jnp.bfloat16), w2_ref[...],
                 preferred_element_type=jnp.float32) + b2_ref[...]
    h2 = jnp.maximum(h2, 0.0)
    m = jnp.dot(h2.astype(jnp.bfloat16), wm_ref[...],
                preferred_element_type=jnp.float32) + bm_ref[...]
    mean = jnp.tanh(m)
    out_ref[...] = (mean * scale_ref[...] + bias_ref[...]).astype(out_ref.dtype)


def deterministic_policy_forward(state, params, *, block_b=None):
    """state: (B, num_inputs) float32. Returns mean: (B, num_actions) float32."""
    w1, b1, w2, b2, wm, bm, action_scale, action_bias = params
    B, num_inputs = state.shape
    hidden = w1.shape[1]
    num_actions = wm.shape[1]

    # ---- batch tiling ------------------------------------------------------
    if block_b is None:
        # Single tile for small B (per-step overhead dominates); >=256-row
        # tiles / >=2 steps only when B is large, so v7x megacore gets both TCs.
        block_b = B if B < 512 else 256
    if block_b >= B:
        b_pad = _round_up(max(B, 8), 8)
        block_b = b_pad                    # one grid step, block == full batch
    else:
        block_b = _round_up(block_b, 16)   # bf16 sublane-safe batch tile
        b_pad = _round_up(B, block_b)      # never drop trailing rows
    grid = (pl.cdiv(b_pad, block_b),)

    # ---- lane-dense output: pad the action dim to a multiple of 128 --------
    n_pad = _round_up(num_actions, 128)

    # In a real training loop these casts/pads would be done once at weight
    # init time rather than per call; they are cheap XLA ops here.
    x = state
    if b_pad > B:
        x = jnp.pad(x, ((0, b_pad - B), (0, 0)))
    x = x.astype(jnp.bfloat16)
    w1c = w1.astype(jnp.bfloat16)
    w2c = w2.astype(jnp.bfloat16)
    wmc = jnp.pad(wm, ((0, 0), (0, n_pad - num_actions))).astype(jnp.bfloat16)
    bmc = jnp.pad(bm, ((0, 0), (0, n_pad - num_actions))).astype(jnp.float32)
    scalec = jnp.pad(action_scale, ((0, 0), (0, n_pad - num_actions))).astype(jnp.float32)
    biasc = jnp.pad(action_bias, ((0, 0), (0, n_pad - num_actions))).astype(jnp.float32)
    b1c = b1.astype(jnp.float32)
    b2c = b2.astype(jnp.float32)

    def row_map(i):
        return (i, 0)

    def rep_map(i):
        return (0, 0)

    # ---- VMEM budget (x2 headroom, capped below v7x's 64 MiB physical) ----
    vmem_bytes = (
        2 * block_b * num_inputs * 2                                    # state bf16, 2 bufs
        + 2 * block_b * n_pad * 4                                       # out f32, 2 bufs
        + 2 * 2 * (num_inputs * hidden + hidden * hidden + hidden * n_pad)  # bf16 weights, 2 bufs
        + 2 * 4 * (2 * hidden + 3 * n_pad)                              # f32 biases/scale/bias
        + 4 * block_b * (2 * hidden + n_pad)                            # f32 intermediates
    )
    vmem_limit = int(min(48 << 20, max(16 << 20, 2 * vmem_bytes)))

    cost = pl.CostEstimate(
        flops=2 * b_pad * (num_inputs * hidden + hidden * hidden + hidden * n_pad),
        transcendentals=b_pad * n_pad,
        bytes_accessed=(b_pad * num_inputs * 2
                        + 2 * (num_inputs * hidden + hidden * hidden + hidden * n_pad)
                        + 4 * (2 * hidden + 3 * n_pad)
                        + b_pad * n_pad * 4),
    )

    out = pl.pallas_call(
        _policy_kernel,
        out_shape=jax.ShapeDtypeStruct((b_pad, n_pad), jnp.float32),
        grid_spec=pltpu.PrefetchScalarGridSpec(
            num_scalar_prefetch=0,
            grid=grid,
            in_specs=[
                pl.BlockSpec((block_b, num_inputs), row_map),   # state (bf16)
                pl.BlockSpec((num_inputs, hidden), rep_map),    # W1 (bf16)
                pl.BlockSpec((1, hidden), rep_map),             # b1 (f32)
                pl.BlockSpec((hidden, hidden), rep_map),        # W2 (bf16)
                pl.BlockSpec((1, hidden), rep_map),             # b2 (f32)
                pl.BlockSpec((hidden, n_pad), rep_map),         # Wm (bf16, lane-padded)
                pl.BlockSpec((1, n_pad), rep_map),              # bm
                pl.BlockSpec((1, n_pad), rep_map),              # action_scale
                pl.BlockSpec((1, n_pad), rep_map),              # action_bias
            ],
            out_specs=pl.BlockSpec((block_b, n_pad), row_map),
        ),
        compiler_params=pltpu.CompilerParams(
            dimension_semantics=("parallel",),
            vmem_limit_bytes=vmem_limit),
        cost_estimate=cost,
    )(x, w1c, b1c, w2c, b2c, wmc, bmc, scalec, biasc)

    return out[:B, :num_actions]


def xavier_uniform(key, fan_in, fan_out, gain=1.0):
    # Matches torch.nn.init.xavier_uniform_ (gain=1); returned as (in, out).
    limit = gain * math.sqrt(6.0 / (fan_in + fan_out))
    return jax.random.uniform(key, (fan_in, fan_out), jnp.float32, -limit, limit)


def init_params(key, num_inputs, num_actions, hidden_dim, action_space=None):
    k1, k2, k3 = jax.random.split(key, 3)
    w1 = xavier_uniform(k1, num_inputs, hidden_dim)
    b1 = jnp.zeros((1, hidden_dim), jnp.float32)
    w2 = xavier_uniform(k2, hidden_dim, hidden_dim)
    b2 = jnp.zeros((1, hidden_dim), jnp.float32)
    wm = xavier_uniform(k3, hidden_dim, num_actions)
    bm = jnp.zeros((1, num_actions), jnp.float32)
    if action_space is None:
        action_scale = jnp.ones((1, num_actions), jnp.float32)
        action_bias = jnp.zeros((1, num_actions), jnp.float32)
    else:
        high, low = action_space
        action_scale = ((high - low) / 2.0).reshape(1, num_actions).astype(jnp.float32)
        action_bias = ((high + low) / 2.0).reshape(1, num_actions).astype(jnp.float32)
    return (w1, b1, w2, b2, wm, bm, action_scale, action_bias)


def reference_forward_matched(state, params):
    """Pure-JAX reference in the same precision regime as the kernel."""
    w1, b1, w2, b2, wm, bm, s, b = params
    bf = jnp.bfloat16
    h1 = jnp.maximum(jnp.dot(state.astype(bf), w1.astype(bf),
                             preferred_element_type=jnp.float32) + b1, 0.0)
    h2 = jnp.maximum(jnp.dot(h1.astype(bf), w2.astype(bf),
                             preferred_element_type=jnp.float32) + b2, 0.0)
    m = jnp.dot(h2.astype(bf), wm.astype(bf),
                preferred_element_type=jnp.float32) + bm
    return jnp.tanh(m) * s + b


def reference_forward_f32(state, params):
    """Full-f32 reference matching the original PyTorch module."""
    w1, b1, w2, b2, wm, bm, s, b = params
    h1 = jnp.maximum(state @ w1 + b1, 0.0)
    h2 = jnp.maximum(h1 @ w2 + b2, 0.0)
    return jnp.tanh(h2 @ wm + bm) * s + b


if __name__ == "__main__":
    # Small shapes consistent with the module: num_inputs=16, hidden_dim=32,
    # num_actions=4, batch=8.
    B, num_inputs, hidden_dim, num_actions = 8, 16, 32, 4

    key = jax.random.PRNGKey(0)
    kp, kx = jax.random.split(key)
    params = init_params(kp, num_inputs, num_actions, hidden_dim)
    state = jax.random.normal(kx, (B, num_inputs), jnp.float32)

    mean = deterministic_policy_forward(state, params)
    mean = jax.block_until_ready(mean)

    ref_matched = reference_forward_matched(state, params)
    ref_f32 = reference_forward_f32(state, params)
    assert mean.shape == (B, num_actions)
    assert jnp.allclose(mean, ref_matched, atol=1e-4, rtol=1e-4)
    assert jnp.allclose(mean, ref_f32, atol=2e-2, rtol=2e-2)

    # TODO(synk): `sample()` uses an in-place torch .normal_() noise buffer;
    # the noise add + clamp is a trivial elementwise op outside the hot path.
    print("KERNEL_OK")
</pallas_src>

<mosaic_0001>
module attributes {stable_mosaic.version = 11 : i64} {
  func.func @_policy_kernel(%arg0: i32, %arg1: memref<8x16xbf16, #tpu.memory_space<vmem>>, %arg2: memref<16x32xbf16, #tpu.memory_space<vmem>>, %arg3: memref<1x32xf32, #tpu.memory_space<vmem>>, %arg4: memref<32x32xbf16, #tpu.memory_space<vmem>>, %arg5: memref<1x32xf32, #tpu.memory_space<vmem>>, %arg6: memref<32x128xbf16, #tpu.memory_space<vmem>>, %arg7: memref<1x128xf32, #tpu.memory_space<vmem>>, %arg8: memref<1x128xf32, #tpu.memory_space<vmem>>, %arg9: memref<1x128xf32, #tpu.memory_space<vmem>>, %arg10: memref<8x128xf32, #tpu.memory_space<vmem>>) attributes {dimension_semantics = [#tpu.dimension_semantics<parallel>], iteration_bounds = array<i64: 1>, scalar_prefetch = 0 : i64, scratch_operands = 0 : i64, tpu.core_type = #tpu.core_type<tc>, window_params = [{transform_indices = @transform_0, window_bounds = array<i64: 8, 16>}, {pipeline_mode = #tpu.pipeline_mode<synchronous>, transform_indices = @transform_1, window_bounds = array<i64: 16, 32>}, {pipeline_mode = #tpu.pipeline_mode<synchronous>, transform_indices = @transform_2, window_bounds = array<i64: 1, 32>}, {pipeline_mode = #tpu.pipeline_mode<synchronous>, transform_indices = @transform_3, window_bounds = array<i64: 32, 32>}, {pipeline_mode = #tpu.pipeline_mode<synchronous>, transform_indices = @transform_4, window_bounds = array<i64: 1, 32>}, {pipeline_mode = #tpu.pipeline_mode<synchronous>, transform_indices = @transform_5, window_bounds = array<i64: 32, 128>}, {pipeline_mode = #tpu.pipeline_mode<synchronous>, transform_indices = @transform_6, window_bounds = array<i64: 1, 128>}, {pipeline_mode = #tpu.pipeline_mode<synchronous>, transform_indices = @transform_7, window_bounds = array<i64: 1, 128>}, {pipeline_mode = #tpu.pipeline_mode<synchronous>, transform_indices = @transform_8, window_bounds = array<i64: 1, 128>}, {transform_indices = @transform_9, window_bounds = array<i64: 8, 128>}]} {
    %c0 = arith.constant 0 : index
    %c0_0 = arith.constant 0 : index
    %0 = vector.load %arg1[%c0, %c0_0] : memref<8x16xbf16, #tpu.memory_space<vmem>>, vector<8x16xbf16>
    %c0_1 = arith.constant 0 : index
    %c0_2 = arith.constant 0 : index
    %1 = vector.load %arg2[%c0_1, %c0_2] : memref<16x32xbf16, #tpu.memory_space<vmem>>, vector<16x32xbf16>
    %cst = arith.constant dense<0.000000e+00> : vector<8x32xf32>
    %2 = tpu.matmul %0, %1, %cst {dimension_numbers = #tpu.dot_dimension_numbers<[1], [0], [0], [1], [0, 0, 1, 1], [], []>} : vector<8x16xbf16>, vector<16x32xbf16>, vector<8x32xf32> -> vector<8x32xf32>
    %c0_3 = arith.constant 0 : index
    %c0_4 = arith.constant 0 : index
    %3 = vector.load %arg3[%c0_3, %c0_4] : memref<1x32xf32, #tpu.memory_space<vmem>>, vector<1x32xf32>
    %4 = vector.broadcast %3 : vector<1x32xf32> to vector<8x32xf32>
    %5 = arith.addf %2, %4 : vector<8x32xf32>
    %cst_5 = arith.constant 0.000000e+00 : f32
    %6 = vector.broadcast %cst_5 : f32 to vector<8x32xf32>
    %7 = arith.maximumf %5, %6 : vector<8x32xf32>
    %8 = arith.truncf %7 : vector<8x32xf32> to vector<8x32xbf16>
    %c0_6 = arith.constant 0 : index
    %c0_7 = arith.constant 0 : index
    %9 = vector.load %arg4[%c0_6, %c0_7] : memref<32x32xbf16, #tpu.memory_space<vmem>>, vector<32x32xbf16>
    %cst_8 = arith.constant dense<0.000000e+00> : vector<8x32xf32>
    %10 = tpu.matmul %8, %9, %cst_8 {dimension_numbers = #tpu.dot_dimension_numbers<[1], [0], [0], [1], [0, 0, 1, 1], [], []>} : vector<8x32xbf16>, vector<32x32xbf16>, vector<8x32xf32> -> vector<8x32xf32>
    %c0_9 = arith.constant 0 : index
    %c0_10 = arith.constant 0 : index
    %11 = vector.load %arg5[%c0_9, %c0_10] : memref<1x32xf32, #tpu.memory_space<vmem>>, vector<1x32xf32>
    %12 = vector.broadcast %11 : vector<1x32xf32> to vector<8x32xf32>
    %13 = arith.addf %10, %12 : vector<8x32xf32>
    %cst_11 = arith.constant 0.000000e+00 : f32
    %14 = vector.broadcast %cst_11 : f32 to vector<8x32xf32>
    %15 = arith.maximumf %13, %14 : vector<8x32xf32>
    %16 = arith.truncf %15 : vector<8x32xf32> to vector<8x32xbf16>
    %c0_12 = arith.constant 0 : index
    %c0_13 = arith.constant 0 : index
    %17 = vector.load %arg6[%c0_12, %c0_13] : memref<32x128xbf16, #tpu.memory_space<vmem>>, vector<32x128xbf16>
    %cst_14 = arith.constant dense<0.000000e+00> : vector<8x128xf32>
    %18 = tpu.matmul %16, %17, %cst_14 {dimension_numbers = #tpu.dot_dimension_numbers<[1], [0], [0], [1], [0, 0, 1, 1], [], []>} : vector<8x32xbf16>, vector<32x128xbf16>, vector<8x128xf32> -> vector<8x128xf32>
    %c0_15 = arith.constant 0 : index
    %c0_16 = arith.constant 0 : index
    %19 = vector.load %arg7[%c0_15, %c0_16] : memref<1x128xf32, #tpu.memory_space<vmem>>, vector<1x128xf32>
    %20 = vector.broadcast %19 : vector<1x128xf32> to vector<8x128xf32>
    %21 = arith.addf %18, %20 : vector<8x128xf32>
    %22 = math.tanh %21 : vector<8x128xf32>
    %c0_17 = arith.constant 0 : index
    %c0_18 = arith.constant 0 : index
    %23 = vector.load %arg8[%c0_17, %c0_18] : memref<1x128xf32, #tpu.memory_space<vmem>>, vector<1x128xf32>
    %24 = vector.broadcast %23 : vector<1x128xf32> to vector<8x128xf32>
    %25 = arith.mulf %22, %24 : vector<8x128xf32>
    %c0_19 = arith.constant 0 : index
    %c0_20 = arith.constant 0 : index
    %26 = vector.load %arg9[%c0_19, %c0_20] : memref<1x128xf32, #tpu.memory_space<vmem>>, vector<1x128xf32>
    %27 = vector.broadcast %26 : vector<1x128xf32> to vector<8x128xf32>
    %28 = arith.addf %25, %27 : vector<8x128xf32>
    %c0_21 = arith.constant 0 : index
    %c0_22 = arith.constant 0 : index
    %29 = vector.load %arg10[%c0_21, %c0_22] : memref<8x128xf32, #tpu.memory_space<vmem>>, vector<8x128xf32>
    tpu.vector_store %arg10[%c0_21, %c0_22], %28 {strides = array<i32>} : memref<8x128xf32, #tpu.memory_space<vmem>>, vector<8x128xf32>,
    return
  }
  func.func @transform_0(%arg0: i32) -> (i32, i32) {
    %c0_i32 = arith.constant 0 : i32
    %c0_i32_0 = arith.constant 0 : i32
    return %arg0, %c0_i32 : i32, i32
  }
  func.func @transform_1(%arg0: i32) -> (i32, i32) {
    %c0_i32 = arith.constant 0 : i32
    %c0_i32_0 = arith.constant 0 : i32
    %c0_i32_1 = arith.constant 0 : i32
    return %c0_i32, %c0_i32_0 : i32, i32
  }
  func.func @transform_2(%arg0: i32) -> (i32, i32) {
    %c0_i32 = arith.constant 0 : i32
    %c0_i32_0 = arith.constant 0 : i32
    %c0_i32_1 = arith.constant 0 : i32
    return %c0_i32, %c0_i32_0 : i32, i32
  }
  func.func @transform_3(%arg0: i32) -> (i32, i32) {
    %c0_i32 = arith.constant 0 : i32
    %c0_i32_0 = arith.constant 0 : i32
    %c0_i32_1 = arith.constant 0 : i32
    return %c0_i32, %c0_i32_0 : i32, i32
  }
  func.func @transform_4(%arg0: i32) -> (i32, i32) {
    %c0_i32 = arith.constant 0 : i32
    %c0_i32_0 = arith.constant 0 : i32
    %c0_i32_1 = arith.constant 0 : i32
    return %c0_i32, %c0_i32_0 : i32, i32
  }
  func.func @transform_5(%arg0: i32) -> (i32, i32) {
    %c0_i32 = arith.constant 0 : i32
    %c0_i32_0 = arith.constant 0 : i32
    %c0_i32_1 = arith.constant 0 : i32
    return %c0_i32, %c0_i32_0 : i32, i32
  }
  func.func @transform_6(%arg0: i32) -> (i32, i32) {
    %c0_i32 = arith.constant 0 : i32
    %c0_i32_0 = arith.constant 0 : i32
    %c0_i32_1 = arith.constant 0 : i32
    return %c0_i32, %c0_i32_0 : i32, i32
  }
  func.func @transform_7(%arg0: i32) -> (i32, i32) {
    %c0_i32 = arith.constant 0 : i32
    %c0_i32_0 = arith.constant 0 : i32
    %c0_i32_1 = arith.constant 0 : i32
    return %c0_i32, %c0_i32_0 : i32, i32
  }
  func.func @transform_8(%arg0: i32) -> (i32, i32) {
    %c0_i32 = arith.constant 0 : i32
    %c0_i32_0 = arith.constant 0 : i32
    %c0_i32_1 = arith.constant 0 : i32
    return %c0_i32, %c0_i32_0 : i32, i32
  }
  func.func @transform_9(%arg0: i32) -> (i32, i32) {
    %c0_i32 = arith.constant 0 : i32
    %c0_i32_0 = arith.constant 0 : i32
    return %arg0, %c0_i32 : i32, i32
  }
}

</mosaic_0001>

<llo_original>
// kernel: tpu_custom_call.1
$region0: #{tpu_custom_call.1}
  #allocation0 [shape = 'u32[]', space=smem, size = 0x4, offset = 0x4, fixed_abs, tag = 'smem constant byte address 0x4 - core index']
  #allocation1 [shape = 'u32[144,128]{1,0:T(1,128)}', space=vmem, size = 0x12000, scoped, tag = 'internal scratch']
  %s0 = inlined_call_operand.hbm [shape: bf16[8,16], index: 0, kind: input, shape index: {}]
  %s1 = inlined_call_operand.hbm [shape: bf16[16,32], index: 1, kind: input, shape index: {}]
  %s2 = inlined_call_operand.vmem [shape: f32[1,32], index: 2, kind: input, shape index: {}]
  %s3 = inlined_call_operand.hbm [shape: bf16[32,32], index: 3, kind: input, shape index: {}]
  %s4 = inlined_call_operand.vmem [shape: f32[1,32], index: 4, kind: input, shape index: {}]
  %s5 = inlined_call_operand.hbm [shape: bf16[32,128], index: 5, kind: input, shape index: {}]
  %s6 = inlined_call_operand.vmem [shape: f32[1,128], index: 6, kind: input, shape index: {}]
  %s7 = inlined_call_operand.vmem [shape: f32[1,128], index: 7, kind: input, shape index: {}]
  %s8 = inlined_call_operand.vmem [shape: f32[1,128], index: 8, kind: input, shape index: {}]
  %s9 = inlined_call_operand.hbm [shape: f32[8,128], index: 9, kind: output, shape index: {}]
  %s10 = sld [smem:[#allocation0]]
  $region62: #{tpu_custom_call.1} parent=0
    _
  %s12 = ssub.s32 1, %s10
  %s13 = scalar_select 0, %s12, %s10
  $region1: #{tpu_custom_call.1} parent=0
    #allocation2 [shape = 'u8[2048]{0}', space=vmem, size = 0x800, scoped, tag = 'input window, operand 0, single buffered']
    #allocation3 [shape = 's32[1]{0}', space=sflag, size = 0x4, scoped, tag = 'scoped memory for tpu_custom_call.1']
    #allocation4 [shape = 's32[1]{0}', space=sflag, size = 0x4, scoped, tag = 'scoped memory for tpu_custom_call.1']
    #allocation5 [shape = 'u8[4096]{0}', space=vmem, size = 0x1000, scoped, tag = 'input window, operand 1, single buffered']
    #allocation6 [shape = 's32[1]{0}', space=sflag, size = 0x4, scoped, tag = 'scoped memory for tpu_custom_call.1']
    #allocation7 [shape = 'u8[8192]{0}', space=vmem, size = 0x2000, scoped, tag = 'input window, operand 3, single buffered']
    #allocation8 [shape = 'u8[8192]{0}', space=vmem, size = 0x2000, scoped, tag = 'input window, operand 5, single buffered']
    #allocation9 [shape = 's32[1]{0}', space=sflag, size = 0x4, scoped, tag = 'scoped memory for tpu_custom_call.1']
    #allocation10 [shape = 'u8[4096]{0}', space=vmem, size = 0x1000, scoped, tag = 'output window, operand 0, single buffered']
    %14 = vsyncpa [#allocation3], 0
    %15 = vsyncpa [#allocation6], 0
    %16 = vsyncpa [#allocation9], 0
    %17 = vsyncpa [#allocation4], 0
    // Predicated region
    $region2: #{tpu_custom_call.1} parent=1 // pred_check
      _
    $region3: #{tpu_custom_call.1} parent=1 // pred_check_branch
      %19 = sbr.rel (0) target = $region5
    $region4: #{tpu_custom_call.1} parent=1 // pred_region
      %s21 = ssub.s32 64, 64
      %22 = vsyncadd [#allocation3], %s21
      %s24 = sshll.u32 [#allocation2], 4
      %s25 = int_to_ptr.vmem [resolvable:$true] %s24
      %27 = dma.hbm_to_vmem [thread:$0]  %s0, 64, %s25, [#allocation3]
    $region5: #{tpu_custom_call.1} parent=1 // pred_fallthru
      _
    // Predicated region
    $region6: #{tpu_custom_call.1} parent=1 // pred_check
      _
    $region7: #{tpu_custom_call.1} parent=1 // pred_check_branch
      %29 = sbr.rel (0) target = $region9
    $region8: #{tpu_custom_call.1} parent=1 // pred_region
      %s31 = ssub.s32 128, 128
      %32 = vsyncadd [#allocation6], %s31
      %s33 = sshll.u32 [#allocation5], 4
      %s34 = int_to_ptr.vmem [resolvable:$true] %s33
      %39 = dma.hbm_to_vmem [thread:$0]  %s1, 128, %s34, [#allocation6], 64, 64, 4
    $region9: #{tpu_custom_call.1} parent=1 // pred_fallthru
      _
    // Predicated region
    $region10: #{tpu_custom_call.1} parent=1 // pred_check
      _
    $region11: #{tpu_custom_call.1} parent=1 // pred_check_branch
      %41 = sbr.rel (0) target = $region13
    $region12: #{tpu_custom_call.1} parent=1 // pred_region
      _
    $region13: #{tpu_custom_call.1} parent=1 // pred_fallthru
      _
    // Predicated region
    $region14: #{tpu_custom_call.1} parent=1 // pred_check
      _
    $region15: #{tpu_custom_call.1} parent=1 // pred_check_branch
      %43 = sbr.rel (0) target = $region17
    $region16: #{tpu_custom_call.1} parent=1 // pred_region
      %s45 = ssub.s32 256, 256
      %46 = vsyncadd [#allocation6], %s45
      %s47 = sshll.u32 [#allocation7], 4
      %s48 = int_to_ptr.vmem [resolvable:$true] %s47
      %53 = dma.hbm_to_vmem [thread:$0]  %s3, 256, %s48, [#allocation6], 64, 64, 4
    $region17: #{tpu_custom_call.1} parent=1 // pred_fallthru
      _
    // Predicated region
    $region18: #{tpu_custom_call.1} parent=1 // pred_check
      _
    $region19: #{tpu_custom_call.1} parent=1 // pred_check_branch
      %55 = sbr.rel (0) target = $region21
    $region20: #{tpu_custom_call.1} parent=1 // pred_region
      _
    $region21: #{tpu_custom_call.1} parent=1 // pred_fallthru
      _
    // Predicated region
    $region22: #{tpu_custom_call.1} parent=1 // pred_check
      _
    $region23: #{tpu_custom_call.1} parent=1 // pred_check_branch
      %57 = sbr.rel (0) target = $region25
    $region24: #{tpu_custom_call.1} parent=1 // pred_region
      %s59 = ssub.s32 256, 256
      %60 = vsyncadd [#allocation9], %s59
      %s61 = sshll.u32 [#allocation8], 4
      %s62 = int_to_ptr.vmem [resolvable:$true] %s61
      %67 = dma.hbm_to_vmem [thread:$0]  %s5, 256, %s62, [#allocation9], 64, 64, 4
    $region25: #{tpu_custom_call.1} parent=1 // pred_fallthru
      _
    // Predicated region
    $region26: #{tpu_custom_call.1} parent=1 // pred_check
      _
    $region27: #{tpu_custom_call.1} parent=1 // pred_check_branch
      %69 = sbr.rel (0) target = $region29
    $region28: #{tpu_custom_call.1} parent=1 // pred_region
      _
    $region29: #{tpu_custom_call.1} parent=1 // pred_fallthru
      _
    // Predicated region
    $region30: #{tpu_custom_call.1} parent=1 // pred_check
      _
    $region31: #{tpu_custom_call.1} parent=1 // pred_check_branch
      %71 = sbr.rel (0) target = $region33
    $region32: #{tpu_custom_call.1} parent=1 // pred_region
      _
    $region33: #{tpu_custom_call.1} parent=1 // pred_fallthru
      _
    // Predicated region
    $region34: #{tpu_custom_call.1} parent=1 // pred_check
      _
    $region35: #{tpu_custom_call.1} parent=1 // pred_check_branch
      %73 = sbr.rel (0) target = $region37
    $region36: #{tpu_custom_call.1} parent=1 // pred_region
      _
    $region37: #{tpu_custom_call.1} parent=1 // pred_fallthru
      _
    // Predicated region
    $region38: #{tpu_custom_call.1} parent=1 // pred_check
      _
    $region39: #{tpu_custom_call.1} parent=1 // pred_check_branch
      %75 = sbr.rel (0) target = $region41
    $region40: #{tpu_custom_call.1} parent=1 // pred_region
      %76 = dma.done [#allocation3], 64
    $region41: #{tpu_custom_call.1} parent=1 // pred_fallthru
      _
    // Predicated region
    $region42: #{tpu_custom_call.1} parent=1 // pred_check
      _
    $region43: #{tpu_custom_call.1} parent=1 // pred_check_branch
      %78 = sbr.rel (0) target = $region45
    $region44: #{tpu_custom_call.1} parent=1 // pred_region
      %79 = dma.done [#allocation6], 128
    $region45: #{tpu_custom_call.1} parent=1 // pred_fallthru
      _
    // Predicated region
    $region46: #{tpu_custom_call.1} parent=1 // pred_check
      _
    $region47: #{tpu_custom_call.1} parent=1 // pred_check_branch
      %81 = sbr.rel (0) target = $region49
    $region48: #{tpu_custom_call.1} parent=1 // pred_region
      %82 = dma.done [#allocation6], 256
    $region49: #{tpu_custom_call.1} parent=1 // pred_fallthru
      _
    // Predicated region
    $region50: #{tpu_custom_call.1} parent=1 // pred_check
      _
    $region51: #{tpu_custom_call.1} parent=1 // pred_check_branch
      %84 = sbr.rel (0) target = $region53
    $region52: #{tpu_custom_call.1} parent=1 // pred_region
      %85 = dma.done [#allocation9], 256
    $region53: #{tpu_custom_call.1} parent=1 // pred_fallthru
      _
    %v87 = vld [vmem:[#allocation2] sm:$0xf]
    %v88 = vld [vmem:[#allocation5] sm:$0xf]
    %v89 = vld [vmem:[#allocation5 + $0x4] sm:$0xf]
    %v90 = vld [vmem:[%s2] sm:$0x1]
    %v92 = vlaneseq
    %v93 = vshrl.u32 %v92, 7
    %v94 = vsub.s32 0, %v93
    %v95 = vrot.slane %v90, %v94
    %v99 = vunpack.c.l.b16 %v88
    %v100 = vunpack.c.l.b16 %v89
    %v101 = vpack.c.b16 %v100, %v99
    %vm103 = vcmask 130048
    %v105 = vsel %vm103, %v87, 0
    %107 = vmatprep.subr.bf16.mxu0 0
    %108 = vmatpush1.bf16.msra.mxu0 0
    %109 = vmatprep.subr.bf16.mxu0 0
    %110 = vmatpush1.bf16.msra.mxu0 0
    %111 = vmatprep.subr.bf16.mxu0 0
    %112 = vmatpush1.bf16.msra.mxu0 0
    %113 = vmatprep.subr.bf16.mxu0 0
    %114 = vmatpush1.bf16.msra.mxu0 0
    %115 = vmatprep.subr.bf16.mxu0 0
    %116 = vmatpush1.bf16.msra.mxu0 0
    %117 = vmatprep.subr.bf16.mxu0 0
    %118 = vmatpush1.bf16.msra.mxu0 0
    %119 = vmatprep.subr.bf16.mxu0 0
    %120 = vmatpush1.bf16.msra.mxu0 0
    %121 = vmatprep.subr.bf16.mxu0 0
    %122 = vmatpush1.bf16.msra.mxu0 %v101
    %123 = vmatprep.subr.bf16.mxu0 0
    %124 = vmatpush2.bf16.msra.mxu0 0
    %125 = vmatprep.subr.bf16.mxu0 0
    %126 = vmatpush2.bf16.msra.mxu0 0
    %127 = vmatprep.subr.bf16.mxu0 0
    %128 = vmatpush2.bf16.msra.mxu0 0
    %129 = vmatprep.subr.bf16.mxu0 0
    %130 = vmatpush2.bf16.msra.mxu0 0
    %131 = vmatprep.subr.bf16.mxu0 0
    %132 = vmatpush2.bf16.msra.mxu0 0
    %133 = vmatprep.subr.bf16.mxu0 0
    %134 = vmatpush2.bf16.msra.mxu0 0
    %135 = vmatprep.subr.bf16.mxu0 0
    %136 = vmatpush2.bf16.msra.mxu0 0
    %137 = vmatprep.subr.bf16.mxu0 0
    %138 = vmatpush2.bf16.msra.mxu0 0
    %139 = vmatprep.mubr.bf16.mxu0 0
    %140 = vmatmul.mubr.bf16.gmra.mxu0 %v105
    %v141 = vpop.f32.mrf.mxu0
    %v142 = vadd.f32 %v95, %v141
    %v143 = vpop.f32.mrf.mxu0
    %v144 = vpop.f32.mrf.mxu0
    %v145 = vpop.f32.mrf.mxu0
    %146 = vdwg.mxu0
    %v147 = vmax.f32 %v142, 0.0
    %v148 = vpack.c.bf16 %v147, %v147
    %v149 = vld [vmem:[#allocation7] sm:$0xf]
    %v150 = vld [vmem:[#allocation7 + $0x4] sm:$0xf]
    %v151 = vld [vmem:[#allocation7 + $0x8] sm:$0xf]
    %v152 = vld [vmem:[#allocation7 + $0xc] sm:$0xf]
    %v153 = vld [vmem:[%s4] sm:$0x1]
    %v155 = vlaneseq
    %v156 = vshrl.u32 %v155, 7
    %v157 = vsub.s32 0, %v156
    %v158 = vrot.slane %v153, %v157
    %v164 = vunpack.c.l.b16 %v149
    %v165 = vunpack.c.l.b16 %v150
    %v166 = vunpack.c.l.b16 %v151
    %v167 = vunpack.c.l.b16 %v152
    %v168 = vpack.c.b16 %v165, %v164
    %v169 = vpack.c.b16 %v167, %v166
    %vm172 = vcmask 261120
    %v174 = vsel %vm172, %v148, 0
    %176 = vmatprep.subr.bf16.mxu0 0
    %177 = vmatpush1.bf16.msra.mxu0 0
    %178 = vmatprep.subr.bf16.mxu0 0
    %179 = vmatpush1.bf16.msra.mxu0 0
    %180 = vmatprep.subr.bf16.mxu0 0
    %181 = vmatpush1.bf16.msra.mxu0 0
    %182 = vmatprep.subr.bf16.mxu0 0
    %183 = vmatpush1.bf16.msra.mxu0 0
    %184 = vmatprep.subr.bf16.mxu0 0
    %185 = vmatpush1.bf16.msra.mxu0 0
    %186 = vmatprep.subr.bf16.mxu0 0
    %187 = vmatpush1.bf16.msra.mxu0 0
    %188 = vmatprep.subr.bf16.mxu0 0
    %189 = vmatpush1.bf16.msra.mxu0 %v169
    %190 = vmatprep.subr.bf16.mxu0 0
    %191 = vmatpush1.bf16.msra.mxu0 %v168
    %192 = vmatprep.subr.bf16.mxu0 0
    %193 = vmatpush2.bf16.msra.mxu0 0
    %194 = vmatprep.subr.bf16.mxu0 0
    %195 = vmatpush2.bf16.msra.mxu0 0
    %196 = vmatprep.subr.bf16.mxu0 0
    %197 = vmatpush2.bf16.msra.mxu0 0
    %198 = vmatprep.subr.bf16.mxu0 0
    %199 = vmatpush2.bf16.msra.mxu0 0
    %200 = vmatprep.subr.bf16.mxu0 0
    %201 = vmatpush2.bf16.msra.mxu0 0
    %202 = vmatprep.subr.bf16.mxu0 0
    %203 = vmatpush2.bf16.msra.mxu0 0
    %204 = vmatprep.subr.bf16.mxu0 0
    %205 = vmatpush2.bf16.msra.mxu0 0
    %206 = vmatprep.subr.bf16.mxu0 0
    %207 = vmatpush2.bf16.msra.mxu0 0
    %208 = vmatprep.mubr.bf16.mxu0 0
    %209 = vmatmul.mubr.bf16.gmra.mxu0 %v174
    %v210 = vpop.f32.mrf.mxu0
    %v211 = vadd.f32 %v158, %v210
    %v212 = vpop.f32.mrf.mxu0
    %v213 = vpop.f32.mrf.mxu0
    %v214 = vpop.f32.mrf.mxu0
    %215 = vdwg.mxu0
    %v216 = vmax.f32 %v211, 0.0
    %v217 = vpack.c.bf16 %v216, %v216
    %v218 = vld [vmem:[#allocation8] sm:$0xf]
    %v219 = vld [vmem:[#allocation8 + $0x4] sm:$0xf]
    %v220 = vld [vmem:[#allocation8 + $0x8] sm:$0xf]
    %v221 = vld [vmem:[#allocation8 + $0xc] sm:$0xf]
    %v222 = vld [vmem:[%s6] sm:$0x1]
    %v224 = vlaneseq
    %v225 = vshrl.u32 %v224, 7
    %v226 = vsub.s32 0, %v225
    %v227 = vrot.slane %v222, %v226
    %v233 = vunpack.c.l.b16 %v218
    %v234 = vunpack.c.l.b16 %v219
    %v235 = vunpack.c.l.b16 %v220
    %v236 = vunpack.c.l.b16 %v221
    %v237 = vpack.c.b16 %v234, %v233
    %v238 = vpack.c.b16 %v236, %v235
    %v242 = vsel %vm172, %v217, 0
    %244 = vmatprep.subr.bf16.mxu0 0
    %245 = vmatpush1.bf16.msra.mxu0 0
    %246 = vmatprep.subr.bf16.mxu0 0
    %247 = vmatpush1.bf16.msra.mxu0 0
    %248 = vmatprep.subr.bf16.mxu0 0
    %249 = vmatpush1.bf16.msra.mxu0 0
    %250 = vmatprep.subr.bf16.mxu0 0
    %251 = vmatpush1.bf16.msra.mxu0 0
    %252 = vmatprep.subr.bf16.mxu0 0
    %253 = vmatpush1.bf16.msra.mxu0 0
    %254 = vmatprep.subr.bf16.mxu0 0
    %255 = vmatpush1.bf16.msra.mxu0 0
    %256 = vmatprep.subr.bf16.mxu0 0
    %257 = vmatpush1.bf16.msra.mxu0 %v238
    %258 = vmatprep.subr.bf16.mxu0 0
    %259 = vmatpush1.bf16.msra.mxu0 %v237
    %260 = vmatprep.subr.bf16.mxu0 0
    %261 = vmatpush2.bf16.msra.mxu0 0
    %262 = vmatprep.subr.bf16.mxu0 0
    %263 = vmatpush2.bf16.msra.mxu0 0
    %264 = vmatprep.subr.bf16.mxu0 0
    %265 = vmatpush2.bf16.msra.mxu0 0
    %266 = vmatprep.subr.bf16.mxu0 0
    %267 = vmatpush2.bf16.msra.mxu0 0
    %268 = vmatprep.subr.bf16.mxu0 0
    %269 = vmatpush2.bf16.msra.mxu0 0
    %270 = vmatprep.subr.bf16.mxu0 0
    %271 = vmatpush2.bf16.msra.mxu0 0
    %272 = vmatprep.subr.bf16.mxu0 0
    %273 = vmatpush2.bf16.msra.mxu0 0
    %274 = vmatprep.subr.bf16.mxu0 0
    %275 = vmatpush2.bf16.msra.mxu0 0
    %276 = vmatprep.mubr.bf16.mxu0 0
    %277 = vmatmul.mubr.bf16.gmra.mxu0 %v242
    %v278 = vpop.f32.mrf.mxu0
    %v279 = vadd.f32 %v227, %v278
    %v280 = vpop.f32.mrf.mxu0
    %v281 = vpop.f32.mrf.mxu0
    %v282 = vpop.f32.mrf.mxu0
    %283 = vdwg.mxu0
    %v284 = vtanh.pop %v279
    %v285 = vld [vmem:[%s7] sm:$0x1]
    %v287 = vlaneseq
    %v288 = vshrl.u32 %v287, 7
    %v289 = vsub.s32 0, %v288
    %v290 = vrot.slane %v285, %v289
    %v292 = vmul.f32 %v284, %v290
    %v293 = vld [vmem:[%s8] sm:$0x1]
    %v295 = vlaneseq
    %v296 = vshrl.u32 %v295, 7
    %v297 = vsub.s32 0, %v296
    %v298 = vrot.slane %v293, %v297
    %v300 = vadd.f32 %v292, %v298
    %301 = vst [vmem:[#allocation10] sm:$0xff] %v300
    // Predicated region
    $region54: #{tpu_custom_call.1} parent=1 // pred_check
      _
    $region55: #{tpu_custom_call.1} parent=1 // pred_check_branch
      %303 = sbr.rel (0) target = $region57
    $region56: #{tpu_custom_call.1} parent=1 // pred_region
      %s305 = ssub.s32 128, 128
      %306 = vsyncadd [#allocation4], %s305
      %s308 = sshll.u32 [#allocation10], 4
      %s309 = int_to_ptr.vmem [resolvable:$true] %s308
      %311 = dma.vmem_to_hbm [thread:$0]  %s309, 128, %s9, [#allocation4]
    $region57: #{tpu_custom_call.1} parent=1 // pred_fallthru
      _
    // Predicated region
    $region58: #{tpu_custom_call.1} parent=1 // pred_check
      _
    $region59: #{tpu_custom_call.1} parent=1 // pred_check_branch
      %313 = sbr.rel (0) target = $region61
    $region60: #{tpu_custom_call.1} parent=1 // pred_region
      %314 = dma.done [#allocation4], 128
    $region61: #{tpu_custom_call.1} parent=1 // pred_fallthru
      _
    %315 = vsyncpa [#allocation3], 1
    %316 = vsyncpa [#allocation6], 1
    %317 = vsyncpa [#allocation9], 1
    %318 = vsyncpa [#allocation4], 1

</llo_original>
